<compile_context>
chip_gen: v7x
topology: tpu7x:2x2x1
jax: 0.10.0
libtpu: 0.0.40
codegen_flags: <defaults>
</compile_context>

<pallas_src>
import math
import jax
import jax.numpy as jnp
from jax import lax
from jax.experimental import pallas as pl
from jax.experimental.pallas import tpu as pltpu

LOG2E = math.log2(math.e)


# ------------------------------ helpers ------------------------------------ #

def _pick_tile(dim, target, align):
    """Largest tile <= target that divides dim and is `align`-aligned, else dim."""
    if dim <= target:
        return dim
    t = (target // align) * align
    while t >= align:
        if dim % t == 0:
            return t
        t -= align
    return dim


def _vmem_limit(*block_bytes):
    """Explicit scoped-VMEM limit: 2x (double buffer) per block + margin,
    clamped to [16 MiB, 48 MiB] (safe on v5e/v6e 128 MiB and v7x 64 MiB)."""
    est = sum(2 * int(b) for b in block_bytes) + (4 << 20)
    return int(min(max(est, 16 << 20), 48 << 20))


# ----------------------------- tiled linear -------------------------------- #

def _make_linear_kernel(red_axis, use_scratch):
    """y = x @ w + b with bf16 MXU operands and f32 accumulation.

    use_scratch=False: accumulate directly into the VMEM-resident f32 output
    block (its BlockSpec ignores the reduction index).
    use_scratch=True : f32 scratch accumulator, cast to o_ref.dtype at the end
    (used when the output dtype is bf16)."""
    if use_scratch:
        def kernel(x_ref, w_ref, b_ref, o_ref, acc_ref):
            k = pl.program_id(red_axis)
            xw = jnp.dot(x_ref[...].astype(jnp.bfloat16),
                         w_ref[...].astype(jnp.bfloat16),
                         preferred_element_type=jnp.float32)

            @pl.when(k == 0)
            def _():
                acc_ref[...] = b_ref[...].astype(jnp.float32) + xw

            @pl.when(k != 0)
            def _():
                acc_ref[...] += xw

            @pl.when(k == pl.num_programs(red_axis) - 1)
            def _():
                o_ref[...] = acc_ref[...].astype(o_ref.dtype)
        return kernel

    def kernel(x_ref, w_ref, b_ref, o_ref):
        k = pl.program_id(red_axis)
        xw = jnp.dot(x_ref[...].astype(jnp.bfloat16),
                     w_ref[...].astype(jnp.bfloat16),
                     preferred_element_type=jnp.float32)

        @pl.when(k == 0)
        def _():
            o_ref[...] = b_ref[...].astype(jnp.float32) + xw

        @pl.when(k != 0)
        def _():
            o_ref[...] += xw
    return kernel


def pallas_linear(x, w, b, *, out_dtype=jnp.float32, tm=512, tn=512, tk=512):
    """x: (M, K); w: (K, N) or stacked (P, K, N); b: (N,) or (P, N).
    Returns (M, N) or (P, M, N) = x @ w[p] + b[p] in out_dtype."""
    M, K = x.shape
    stacked = (w.ndim == 3)
    if stacked:
        P, K2, N = w.shape
    else:
        K2, N = w.shape
    assert K == K2

    tm = _pick_tile(M, tm, 8)
    tn = _pick_tile(N, tn, 128)
    tk = _pick_tile(K, tk, 128)

    use_scratch = jnp.dtype(out_dtype) != jnp.dtype(jnp.float32)
    scratch = [pltpu.VMEM((tm, tn), jnp.float32)] if use_scratch else []

    vmem = _vmem_limit(tm * tk * x.dtype.itemsize,
                       tk * tn * w.dtype.itemsize,
                       tm * tn * jnp.dtype(out_dtype).itemsize,
                       tm * tn * 4)

    if stacked:
        grid = (P, M // tm, N // tn, K // tk)
        in_specs = [
            pl.BlockSpec((tm, tk), lambda p, i, j, k: (i, k)),
            pl.BlockSpec((None, tk, tn), lambda p, i, j, k: (p, k, j)),
            pl.BlockSpec((None, 1, tn), lambda p, i, j, k: (p, 0, j)),
        ]
        out_specs = pl.BlockSpec((None, tm, tn), lambda p, i, j, k: (p, i, j))
        out_shape = jax.ShapeDtypeStruct((P, M, N), out_dtype)
        dims = ("parallel", "parallel", "parallel", "arbitrary")
        red_axis = 3
        b_arg = b.reshape(P, 1, N)
    else:
        grid = (M // tm, N // tn, K // tk)
        in_specs = [
            pl.BlockSpec((tm, tk), lambda i, j, k: (i, k)),
            pl.BlockSpec((tk, tn), lambda i, j, k: (k, j)),
            pl.BlockSpec((1, tn), lambda i, j, k: (0, j)),
        ]
        out_specs = pl.BlockSpec((tm, tn), lambda i, j, k: (i, j))
        out_shape = jax.ShapeDtypeStruct((M, N), out_dtype)
        dims = ("parallel", "parallel", "arbitrary")
        red_axis = 2
        b_arg = b.reshape(1, N)

    return pl.pallas_call(
        _make_linear_kernel(red_axis, use_scratch),
        out_shape=out_shape,
        grid=grid,
        in_specs=in_specs,
        out_specs=out_specs,
        scratch_shapes=scratch,
        compiler_params=pltpu.CompilerParams(
            dimension_semantics=dims, vmem_limit_bytes=vmem),
    )(x, w, b_arg)


# ------------------------- flash attention kernel --------------------------- #

def _make_flash_kernel(num_heads, head_dim):
    """One (batch, q-tile, kv-tile) grid step of online-softmax attention.
    q is pre-scaled by log2(e)/sqrt(head_dim), so softmax uses exp2 directly."""
    def kernel(q_ref, k_ref, v_ref, o_ref, m_sc, l_sc, acc_sc):
        ki = pl.program_id(2)

        @pl.when(ki == 0)
        def _():
            m_sc[...] = jnp.full(m_sc.shape, -jnp.inf, m_sc.dtype)
            l_sc[...] = jnp.zeros(l_sc.shape, l_sc.dtype)
            acc_sc[...] = jnp.zeros(acc_sc.shape, acc_sc.dtype)

        q = q_ref[0].astype(jnp.bfloat16)   # (tq,  D)
        k = k_ref[0].astype(jnp.bfloat16)   # (tkv, D)
        v = v_ref[0].astype(jnp.bfloat16)   # (tkv, D)

        # TODO(synk): lax.fori_loop / heads grid axis for num_heads >= 8.
        for h in range(num_heads):
            lo, hi = h * head_dim, (h + 1) * head_dim
            qh, kh, vh = q[:, lo:hi], k[:, lo:hi], v[:, lo:hi]
            # QK^T via dot_general contracting last dims (no XLU transpose).
            s = lax.dot_general(qh, kh, (((1,), (1,)), ((), ())),
                                preferred_element_type=jnp.float32)  # (tq, tkv)
            m_prev = m_sc[h]                                          # (tq, 1)
            m_new = jnp.maximum(m_prev, jnp.max(s, axis=-1, keepdims=True))
            alpha = jnp.exp2(m_prev - m_new)
            p = jnp.exp2(s - m_new)                                   # f32
            l_sc[h] = alpha * l_sc[h] + jnp.sum(p, axis=-1, keepdims=True)
            acc_sc[h] = alpha * acc_sc[h] + jnp.dot(
                p.astype(jnp.bfloat16), vh, preferred_element_type=jnp.float32)
            m_sc[h] = m_new

        @pl.when(ki == pl.num_programs(2) - 1)
        def _():
            if head_dim % 128 == 0:
                # Per-head lane-aligned stores: bounded live ranges, no concat.
                for h in range(num_heads):
                    inv = pl.reciprocal(l_sc[h], approx=True)
                    o_ref[0, :, h * head_dim:(h + 1) * head_dim] = (
                        acc_sc[h] * inv).astype(o_ref.dtype)
            else:
                # Sub-128-lane heads: one lane-dense (tq, D) store.
                o_ref[0] = jnp.concatenate(
                    [(acc_sc[h] * pl.reciprocal(l_sc[h], approx=True)
                      ).astype(o_ref.dtype) for h in range(num_heads)],
                    axis=-1)
    return kernel


def _flash_attention(arrays, leads, num_heads, head_dim, *,
                     out_dtype=jnp.bfloat16, tq=256, tkv=512):
    """arrays = (q, k, v); each is (B, S, D) or stacked (P, B, S, D), in which
    case leads[i] gives its leading index (lets the packed QKV / KV projection
    output feed the kernel three times with no HBM re-slicing)."""
    q_arr, k_arr, v_arr = arrays
    B, Sq, D = q_arr.shape[-3:]
    Skv = k_arr.shape[-2]
    tq = _pick_tile(Sq, tq, 8)
    tkv = _pick_tile(Skv, tkv, 128)

    def spec(lead, is_q):
        t = tq if is_q else tkv
        if lead is None:
            if is_q:
                return pl.BlockSpec((1, t, D), lambda b, qi, ki: (b, qi, 0))
            return pl.BlockSpec((1, t, D), lambda b, qi, ki: (b, ki, 0))
        if is_q:
            return pl.BlockSpec((None, 1, t, D),
                                lambda b, qi, ki, L=lead: (L, b, qi, 0))
        return pl.BlockSpec((None, 1, t, D),
                            lambda b, qi, ki, L=lead: (L, b, ki, 0))

    grid = (B, Sq // tq, Skv // tkv)
    vmem = _vmem_limit(tq * D * 2, 2 * tkv * D * 2,
                       tq * D * jnp.dtype(out_dtype).itemsize,
                       num_heads * tq * (head_dim + 2) * 4)

    return pl.pallas_call(
        _make_flash_kernel(num_heads, head_dim),
        out_shape=jax.ShapeDtypeStruct((B, Sq, D), out_dtype),
        grid=grid,
        in_specs=[spec(leads[0], True), spec(leads[1], False),
                  spec(leads[2], False)],
        out_specs=pl.BlockSpec((1, tq, D), lambda b, qi, ki: (b, qi, 0)),
        scratch_shapes=[
            pltpu.VMEM((num_heads, tq, 1), jnp.float32),          # running max
            pltpu.VMEM((num_heads, tq, 1), jnp.float32),          # running sum
            pltpu.VMEM((num_heads, tq, head_dim), jnp.float32),   # running acc
        ],
        compiler_params=pltpu.CompilerParams(
            dimension_semantics=("parallel", "parallel", "arbitrary"),
            vmem_limit_bytes=vmem),
    )(q_arr, k_arr, v_arr)


# ------------------------------- module ------------------------------------- #

class MultiHeadAttentionPallas:
    def __init__(self, d_model, num_heads, key):
        assert d_model % num_heads == 0
        self.d_model = d_model
        self.num_heads = num_heads
        self.head_dim = d_model // num_heads

        keys = jax.random.split(key, 8)
        bound = 1.0 / math.sqrt(d_model)

        def init_linear(kw, kb):
            # Stored as (Din, Dout) so kernels compute x @ W + b,
            # matching torch's x @ W_t.T + b semantics.
            w = jax.random.uniform(kw, (d_model, d_model), jnp.float32,
                                   -bound, bound)
            b = jax.random.uniform(kb, (d_model,), jnp.float32, -bound, bound)
            return w, b

        self.wq, self.bq = init_linear(keys[0], keys[1])
        self.wk, self.bk = init_linear(keys[2], keys[3])
        self.wv, self.bv = init_linear(keys[4], keys[5])
        self.wo, self.bo = init_linear(keys[6], keys[7])

        # Fold 1/sqrt(head_dim) AND log2(e) into the Q projection once so the
        # attention kernel can use exp2 (drops O(S^2) VPU multiplies per head).
        scale = LOG2E / math.sqrt(self.head_dim)
        wq_s = self.wq * scale
        bq_s = self.bq * scale

        # Kernel-side parameters: bf16 weights (MXU operands), f32 biases.
        self.wq_s = wq_s.astype(jnp.bfloat16)
        self.bq_s = bq_s
        self.wk_b = self.wk.astype(jnp.bfloat16)
        self.wv_b = self.wv.astype(jnp.bfloat16)
        self.wo_b = self.wo.astype(jnp.bfloat16)
        # Fused stacked projections.
        self.w_qkv = jnp.stack([wq_s, self.wk, self.wv]).astype(jnp.bfloat16)
        self.b_qkv = jnp.stack([bq_s, self.bk, self.bv])
        self.w_kv = jnp.stack([self.wk, self.wv]).astype(jnp.bfloat16)
        self.b_kv = jnp.stack([self.bk, self.bv])

    def __call__(self, query, key, value):
        # TODO(synk): optional attention `mask` not implemented (mask=None only).
        B, Sq, D = query.shape
        H, hd = self.num_heads, self.head_dim

        if (query is key) and (key is value):
            # Self-attention fast path: one fused (3,D,D) projection; the packed
            # (3,B,S,D) bf16 result feeds the attention kernel three times via
            # different BlockSpecs (no HBM slicing pass).
            qkv = pallas_linear(query.reshape(B * Sq, D), self.w_qkv, self.b_qkv,
                                out_dtype=jnp.bfloat16).reshape(3, B, Sq, D)
            o = _flash_attention((qkv, qkv, qkv), (0, 1, 2), H, hd)
        elif key is value:
            # Encoder-decoder attention: fuse K and V projections into (2,D,D).
            Skv = key.shape[1]
            q = pallas_linear(query.reshape(B * Sq, D), self.wq_s, self.bq_s,
                              out_dtype=jnp.bfloat16).reshape(B, Sq, D)
            kv = pallas_linear(key.reshape(B * Skv, D), self.w_kv, self.b_kv,
                               out_dtype=jnp.bfloat16).reshape(2, B, Skv, D)
            o = _flash_attention((q, kv, kv), (None, 0, 1), H, hd)
        else:
            Skv = key.shape[1]
            q = pallas_linear(query.reshape(B * Sq, D), self.wq_s, self.bq_s,
                              out_dtype=jnp.bfloat16).reshape(B, Sq, D)
            k = pallas_linear(key.reshape(B * Skv, D), self.wk_b, self.bk,
                              out_dtype=jnp.bfloat16).reshape(B, Skv, D)
            v = pallas_linear(value.reshape(B * Skv, D), self.wv_b, self.bv,
                              out_dtype=jnp.bfloat16).reshape(B, Skv, D)
            o = _flash_attention((q, k, v), (None, None, None), H, hd)

        out = pallas_linear(o.reshape(B * Sq, D), self.wo_b, self.bo,
                            out_dtype=jnp.float32)
        return out.reshape(B, Sq, D)


# ------------------------------ reference ----------------------------------- #

def reference_mha(mha, query, key, value):
    B, S, D = query.shape
    H, hd = mha.num_heads, mha.head_dim

    def lin(x, w, b):
        return x.reshape(B * S, D) @ w + b

    def split(x):
        return x.reshape(B, S, H, hd).transpose(0, 2, 1, 3)

    Q = split(lin(query, mha.wq, mha.bq))
    K = split(lin(key, mha.wk, mha.bk))
    V = split(lin(value, mha.wv, mha.bv))
    scores = jnp.einsum("bhqd,bhkd->bhqk", Q, K) / math.sqrt(hd)
    attn = jax.nn.softmax(scores, axis=-1)
    out = jnp.einsum("bhqk,bhkd->bhqd", attn, V)
    out = out.transpose(0, 2, 1, 3).reshape(B * S, D)
    return (out @ mha.wo + mha.bo).reshape(B, S, D)


# -------------------------------- main --------------------------------------- #

if __name__ == "__main__":
    B, S, D, H = 2, 8, 32, 4

    root = jax.random.PRNGKey(0)
    k_params, k_q, k_k, k_v = jax.random.split(root, 4)

    mha = MultiHeadAttentionPallas(d_model=D, num_heads=H, key=k_params)

    query = jax.random.normal(k_q, (B, S, D), jnp.float32)
    key = jax.random.normal(k_k, (B, S, D), jnp.float32)
    value = jax.random.normal(k_v, (B, S, D), jnp.float32)

    # Tolerance covers bf16 MXU operands (f32 accumulation) and the EUP
    # approximate-reciprocal softmax denominator.
    TOL = 8e-2

    # Cross-attention (separate Q/K/V projections).
    out = jax.block_until_ready(mha(query, key, value))
    ref = reference_mha(mha, query, key, value)
    assert out.shape == (B, S, D)
    assert jnp.max(jnp.abs(out - ref)) < TOL, jnp.max(jnp.abs(out - ref))

    # Encoder-decoder style (fused KV projection, key is value).
    out_kv = jax.block_until_ready(mha(query, key, key))
    ref_kv = reference_mha(mha, query, key, key)
    assert jnp.max(jnp.abs(out_kv - ref_kv)) < TOL, jnp.max(jnp.abs(out_kv - ref_kv))

    # Self-attention fast path (fused QKV projection, packed attention input).
    out_self = jax.block_until_ready(mha(query, query, query))
    ref_self = reference_mha(mha, query, query, query)
    assert jnp.max(jnp.abs(out_self - ref_self)) < TOL, \
        jnp.max(jnp.abs(out_self - ref_self))

    print("KERNEL_OK")
</pallas_src>

<mosaic_0001>
module attributes {stable_mosaic.version = 11 : i64} {
  func.func @kernel(%arg0: i32, %arg1: i32, %arg2: i32, %arg3: memref<16x32xf32, #tpu.memory_space<vmem>>, %arg4: memref<32x32xbf16, #tpu.memory_space<vmem>>, %arg5: memref<1x32xf32, #tpu.memory_space<vmem>>, %arg6: memref<16x32xbf16, #tpu.memory_space<vmem>>, %arg7: memref<16x32xf32, #tpu.memory_space<vmem>>) attributes {dimension_semantics = [#tpu.dimension_semantics<parallel>, #tpu.dimension_semantics<parallel>, #tpu.dimension_semantics<arbitrary>], iteration_bounds = array<i64: 1, 1, 1>, scalar_prefetch = 0 : i64, scratch_operands = 1 : i64, tpu.core_type = #tpu.core_type<tc>, window_params = [{transform_indices = @transform_0, window_bounds = array<i64: 16, 32>}, {transform_indices = @transform_1, window_bounds = array<i64: 32, 32>}, {transform_indices = @transform_2, window_bounds = array<i64: 1, 32>}, {transform_indices = @transform_3, window_bounds = array<i64: 16, 32>}]} {
    %c0 = arith.constant 0 : index
    %c0_0 = arith.constant 0 : index
    %0 = vector.load %arg3[%c0, %c0_0] : memref<16x32xf32, #tpu.memory_space<vmem>>, vector<16x32xf32>
    %1 = arith.truncf %0 : vector<16x32xf32> to vector<16x32xbf16>
    %c0_1 = arith.constant 0 : index
    %c0_2 = arith.constant 0 : index
    %2 = vector.load %arg4[%c0_1, %c0_2] : memref<32x32xbf16, #tpu.memory_space<vmem>>, vector<32x32xbf16>
    %cst = arith.constant dense<0.000000e+00> : vector<16x32xf32>
    %3 = tpu.matmul %1, %2, %cst {dimension_numbers = #tpu.dot_dimension_numbers<[1], [0], [0], [1], [0, 0, 1, 1], [], []>} : vector<16x32xbf16>, vector<32x32xbf16>, vector<16x32xf32> -> vector<16x32xf32>
    %c0_i32 = arith.constant 0 : i32
    %4 = arith.cmpi eq, %arg2, %c0_i32 : i32
    %5 = arith.extui %4 : i1 to i32
    %c0_i32_3 = arith.constant 0 : i32
    %6 = arith.cmpi ne, %5, %c0_i32_3 : i32
    scf.if %6 {
      %c0_8 = arith.constant 0 : index
      %c0_9 = arith.constant 0 : index
      %13 = vector.load %arg5[%c0_8, %c0_9] : memref<1x32xf32, #tpu.memory_space<vmem>>, vector<1x32xf32>
      %14 = vector.broadcast %13 : vector<1x32xf32> to vector<16x32xf32>
      %15 = arith.addf %14, %3 : vector<16x32xf32>
      %c0_10 = arith.constant 0 : index
      %c0_11 = arith.constant 0 : index
      %16 = vector.load %arg7[%c0_10, %c0_11] : memref<16x32xf32, #tpu.memory_space<vmem>>, vector<16x32xf32>
      tpu.vector_store %arg7[%c0_10, %c0_11], %15 {strides = array<i32>} : memref<16x32xf32, #tpu.memory_space<vmem>>, vector<16x32xf32>,
    } else {
    }
    %c0_i32_4 = arith.constant 0 : i32
    %7 = arith.cmpi ne, %arg2, %c0_i32_4 : i32
    %8 = arith.extui %7 : i1 to i32
    %c0_i32_5 = arith.constant 0 : i32
    %9 = arith.cmpi ne, %8, %c0_i32_5 : i32
    scf.if %9 {
      %c0_8 = arith.constant 0 : index
      %c0_9 = arith.constant 0 : index
      %13 = vector.load %arg7[%c0_8, %c0_9] : memref<16x32xf32, #tpu.memory_space<vmem>>, vector<16x32xf32>
      %14 = arith.addf %13, %3 : vector<16x32xf32>
      %c0_10 = arith.constant 0 : index
      %c0_11 = arith.constant 0 : index
      %15 = vector.load %arg7[%c0_10, %c0_11] : memref<16x32xf32, #tpu.memory_space<vmem>>, vector<16x32xf32>
      tpu.vector_store %arg7[%c0_10, %c0_11], %14 {strides = array<i32>} : memref<16x32xf32, #tpu.memory_space<vmem>>, vector<16x32xf32>,
    } else {
    }
    %c0_i32_6 = arith.constant 0 : i32
    %10 = arith.cmpi eq, %arg2, %c0_i32_6 : i32
    %11 = arith.extui %10 : i1 to i32
    %c0_i32_7 = arith.constant 0 : i32
    %12 = arith.cmpi ne, %11, %c0_i32_7 : i32
    scf.if %12 {
      %c0_8 = arith.constant 0 : index
      %c0_9 = arith.constant 0 : index
      %13 = vector.load %arg7[%c0_8, %c0_9] : memref<16x32xf32, #tpu.memory_space<vmem>>, vector<16x32xf32>
      %14 = arith.truncf %13 : vector<16x32xf32> to vector<16x32xbf16>
      %c0_10 = arith.constant 0 : index
      %c0_11 = arith.constant 0 : index
      %15 = vector.load %arg6[%c0_10, %c0_11] : memref<16x32xbf16, #tpu.memory_space<vmem>>, vector<16x32xbf16>
      tpu.vector_store %arg6[%c0_10, %c0_11], %14 {strides = array<i32>} : memref<16x32xbf16, #tpu.memory_space<vmem>>, vector<16x32xbf16>,
    } else {
    }
    return
  }
  func.func @transform_0(%arg0: i32, %arg1: i32, %arg2: i32) -> (i32, i32) {
    %c0_i32 = arith.constant 0 : i32
    return %arg0, %arg2 : i32, i32
  }
  func.func @transform_1(%arg0: i32, %arg1: i32, %arg2: i32) -> (i32, i32) {
    %c0_i32 = arith.constant 0 : i32
    return %arg2, %arg1 : i32, i32
  }
  func.func @transform_2(%arg0: i32, %arg1: i32, %arg2: i32) -> (i32, i32) {
    %c0_i32 = arith.constant 0 : i32
    %c0_i32_0 = arith.constant 0 : i32
    return %c0_i32, %arg1 : i32, i32
  }
  func.func @transform_3(%arg0: i32, %arg1: i32, %arg2: i32) -> (i32, i32) {
    %c0_i32 = arith.constant 0 : i32
    return %arg0, %arg1 : i32, i32
  }
}

</mosaic_0001>

<llo_original>
// kernel: tpu_custom_call.1
$region0: #{tpu_custom_call.1}
  #allocation0 [shape = 'u32[]', space=smem, size = 0x4, offset = 0x4, fixed_abs, tag = 'smem constant byte address 0x4 - core index']
  #allocation1 [shape = 'u32[144,128]{1,0:T(1,128)}', space=vmem, size = 0x12000, scoped, tag = 'internal scratch']
  #allocation2 [shape = 'f32[16,32]{1,0:T(8,128)}', space=vmem, size = 0x2000, scoped, tag = 'scratch operand']
  %s0 = inlined_call_operand.hbm [shape: f32[16,32], index: 0, kind: input, shape index: {}]
  %s1 = inlined_call_operand.hbm [shape: bf16[32,32], index: 1, kind: input, shape index: {}]
  %s2 = inlined_call_operand.vmem [shape: f32[1,32], index: 2, kind: input, shape index: {}]
  %s3 = inlined_call_operand.hbm [shape: bf16[16,32], index: 3, kind: output, shape index: {}]
  %s4 = sld [smem:[#allocation0]]
  $region42: #{tpu_custom_call.1} parent=0
    _
  %s6 = ssub.s32 1, %s4
  %s7 = scalar_select 0, %s6, %s4
  $region1: #{tpu_custom_call.1} parent=0
    #allocation3 [shape = 'u8[8192]{0}', space=vmem, size = 0x2000, scoped, tag = 'input window, operand 0, single buffered']
    #allocation4 [shape = 's32[1]{0}', space=sflag, size = 0x4, scoped, tag = 'scoped memory for tpu_custom_call.1']
    #allocation5 [shape = 's32[1]{0}', space=sflag, size = 0x4, scoped, tag = 'scoped memory for tpu_custom_call.1']
    #allocation6 [shape = 'u8[8192]{0}', space=vmem, size = 0x2000, scoped, tag = 'input window, operand 1, single buffered']
    #allocation7 [shape = 's32[1]{0}', space=sflag, size = 0x4, scoped, tag = 'scoped memory for tpu_custom_call.1']
    #allocation8 [shape = 'u8[4096]{0}', space=vmem, size = 0x1000, scoped, tag = 'output window, operand 0, single buffered']
    %8 = vsyncpa [#allocation4], 0
    %9 = vsyncpa [#allocation7], 0
    %10 = vsyncpa [#allocation5], 0
    // Predicated region
    $region2: #{tpu_custom_call.1} parent=1 // pred_check
      _
    $region3: #{tpu_custom_call.1} parent=1 // pred_check_branch
      %12 = sbr.rel (0) target = $region5
    $region4: #{tpu_custom_call.1} parent=1 // pred_region
      %s14 = ssub.s32 256, 256
      %15 = vsyncadd [#allocation4], %s14
      %s16 = sshll.u32 [#allocation3], 4
      %s17 = int_to_ptr.vmem [resolvable:$true] %s16
      %22 = dma.hbm_to_vmem [thread:$0]  %s0, 256, %s17, [#allocation4], 128, 128, 8
    $region5: #{tpu_custom_call.1} parent=1 // pred_fallthru
      _
    // Predicated region
    $region6: #{tpu_custom_call.1} parent=1 // pred_check
      _
    $region7: #{tpu_custom_call.1} parent=1 // pred_check_branch
      %24 = sbr.rel (0) target = $region9
    $region8: #{tpu_custom_call.1} parent=1 // pred_region
      %s26 = ssub.s32 256, 256
      %27 = vsyncadd [#allocation7], %s26
      %s28 = sshll.u32 [#allocation6], 4
      %s29 = int_to_ptr.vmem [resolvable:$true] %s28
      %34 = dma.hbm_to_vmem [thread:$0]  %s1, 256, %s29, [#allocation7], 64, 64, 4
    $region9: #{tpu_custom_call.1} parent=1 // pred_fallthru
      _
    // Predicated region
    $region10: #{tpu_custom_call.1} parent=1 // pred_check
      _
    $region11: #{tpu_custom_call.1} parent=1 // pred_check_branch
      %36 = sbr.rel (0) target = $region13
    $region12: #{tpu_custom_call.1} parent=1 // pred_region
      _
    $region13: #{tpu_custom_call.1} parent=1 // pred_fallthru
      _
    // Predicated region
    $region14: #{tpu_custom_call.1} parent=1 // pred_check
      _
    $region15: #{tpu_custom_call.1} parent=1 // pred_check_branch
      %38 = sbr.rel (0) target = $region17
    $region16: #{tpu_custom_call.1} parent=1 // pred_region
      %39 = dma.done [#allocation4], 256
    $region17: #{tpu_custom_call.1} parent=1 // pred_fallthru
      _
    // Predicated region
    $region18: #{tpu_custom_call.1} parent=1 // pred_check
      _
    $region19: #{tpu_custom_call.1} parent=1 // pred_check_branch
      %41 = sbr.rel (0) target = $region21
    $region20: #{tpu_custom_call.1} parent=1 // pred_region
      %42 = dma.done [#allocation7], 256
    $region21: #{tpu_custom_call.1} parent=1 // pred_fallthru
      _
    %v44 = vld [vmem:[#allocation3] sm:$0xff]
    %v45 = vld [vmem:[#allocation3 + $0x8] sm:$0xff]
    %v46 = vpack.c.bf16 %v45, %v44
    %v47 = vld [vmem:[#allocation6] sm:$0xf]
    %v48 = vld [vmem:[#allocation6 + $0x4] sm:$0xf]
    %v49 = vld [vmem:[#allocation6 + $0x8] sm:$0xf]
    %v50 = vld [vmem:[#allocation6 + $0xc] sm:$0xf]
    %v55 = vunpack.c.l.b16 %v47
    %v56 = vunpack.c.l.b16 %v48
    %v57 = vunpack.c.l.b16 %v49
    %v58 = vunpack.c.l.b16 %v50
    %v59 = vpack.c.b16 %v56, %v55
    %v60 = vpack.c.b16 %v58, %v57
    %vm63 = vcmask 261120
    %v65 = vsel %vm63, %v46, 0
    %67 = vmatprep.subr.bf16.mxu0 0
    %68 = vmatpush1.bf16.msra.mxu0 %v59
    %69 = vmatprep.subr.bf16.mxu0 0
    %70 = vmatpush1.bf16.msra.mxu0 %v60
    %71 = vmatprep.subr.bf16.mxu0 0
    %72 = vmatpush1.bf16.msra.mxu0 0
    %73 = vmatprep.subr.bf16.mxu0 0
    %74 = vmatpush1.bf16.msra.mxu0 0
    %75 = vmatprep.subr.bf16.mxu0 0
    %76 = vmatpush1.bf16.msra.mxu0 0
    %77 = vmatprep.subr.bf16.mxu0 0
    %78 = vmatpush1.bf16.msra.mxu0 0
    %79 = vmatprep.subr.bf16.mxu0 0
    %80 = vmatpush1.bf16.msra.mxu0 0
    %81 = vmatprep.subr.bf16.mxu0 0
    %82 = vmatpush1.bf16.msra.mxu0 0
    %83 = vmatprep.subr.bf16.mxu0 0
    %84 = vmatpush1.bf16.msra.mxu0 0
    %85 = vmatprep.subr.bf16.mxu0 0
    %86 = vmatpush1.bf16.msra.mxu0 0
    %87 = vmatprep.subr.bf16.mxu0 0
    %88 = vmatpush1.bf16.msra.mxu0 0
    %89 = vmatprep.subr.bf16.mxu0 0
    %90 = vmatpush1.bf16.msra.mxu0 0
    %91 = vmatprep.subr.bf16.mxu0 0
    %92 = vmatpush1.bf16.msra.mxu0 0
    %93 = vmatprep.subr.bf16.mxu0 0
    %94 = vmatpush1.bf16.msra.mxu0 0
    %95 = vmatprep.subr.bf16.mxu0 0
    %96 = vmatpush1.bf16.msra.mxu0 0
    %97 = vmatprep.subr.bf16.mxu0 0
    %98 = vmatpush1.bf16.msra.mxu0 0
    %99 = vmatprep.mubr.bf16.mxu0 0
    %100 = vmatmul.mubr.bf16.gmra.mrb[0].mxu0 %v65
    %v101 = vpop.f32.mrb[0].mxu0
    %v102 = vadd.f32 0.0, %v101
    %v103 = vpop.f32.mrb[0].mxu0
    %v104 = vpop.f32.mrb[0].mxu0
    %v105 = vadd.f32 0.0, %v104
    %v106 = vpop.f32.mrb[0].mxu0
    %107 = vdwg.mxu0
    %p108 = scmp.eq.s32.totalorder 0, 0
    // Predicated region
    $region22: #{tpu_custom_call.1} parent=1 // pred_check
      %p109 = pneg %p108
    $region23: #{tpu_custom_call.1} parent=1 // pred_check_branch
      %111 = sbr.rel (%p109) target = $region25
    $region24: #{tpu_custom_call.1} parent=1 // pred_region
      %v112 = vld [vmem:[%s2] sm:$0x1]
      %v114 = vlaneseq
      %v115 = vshrl.u32 %v114, 7
      %v116 = vsub.s32 0, %v115
      %v117 = vrot.slane %v112, %v116
      %v119 = vadd.f32 %v117, %v102
      %v120 = vadd.f32 %v117, %v105
      %121 = vst.msk [vmem:[#allocation2] sm:$0xff] %vm63, %v119
      %122 = vst.msk [vmem:[#allocation2 + $0x8] sm:$0xff] %vm63, %v120
    $region25: #{tpu_custom_call.1} parent=1 // pred_fallthru
      _
    %p123 = scmp.ne.s32.totalorder 0, 0
    // Predicated region
    $region26: #{tpu_custom_call.1} parent=1 // pred_check
      %p124 = pneg %p123
    $region27: #{tpu_custom_call.1} parent=1 // pred_check_branch
      %126 = sbr.rel (%p124) target = $region29
    $region28: #{tpu_custom_call.1} parent=1 // pred_region
      %v127 = vld [vmem:[#allocation2] sm:$0xff]
      %v128 = vld [vmem:[#allocation2 + $0x8] sm:$0xff]
      %v129 = vadd.f32 %v127, %v102
      %v130 = vadd.f32 %v128, %v105
      %131 = vst.msk [vmem:[#allocation2] sm:$0xff] %vm63, %v129
      %132 = vst.msk [vmem:[#allocation2 + $0x8] sm:$0xff] %vm63, %v130
    $region29: #{tpu_custom_call.1} parent=1 // pred_fallthru
      _
    // Predicated region
    $region30: #{tpu_custom_call.1} parent=1 // pred_check
      %p133 = pneg %p108
    $region31: #{tpu_custom_call.1} parent=1 // pred_check_branch
      %135 = sbr.rel (%p133) target = $region33
    $region32: #{tpu_custom_call.1} parent=1 // pred_region
      %v136 = vld [vmem:[#allocation2] sm:$0xff]
      %v137 = vld [vmem:[#allocation2 + $0x8] sm:$0xff]
      %v138 = vpack.c.bf16 %v137, %v136
      %v140 = vunpack.c.l.b16 %v138
      %v141 = vunpack.c.h.b16 %v138
      %v142 = vpack.c.b16 %v140, %v140
      %v143 = vpack.c.b16 %v141, %v141
      %vm146 = vcmask 257024
      %147 = vst.msk [vmem:[#allocation8] sm:$0xf] %vm146, %v142
      %148 = vst.msk [vmem:[#allocation8 + $0x4] sm:$0xf] %vm146, %v143
    $region33: #{tpu_custom_call.1} parent=1 // pred_fallthru
      _
    // Predicated region
    $region34: #{tpu_custom_call.1} parent=1 // pred_check
      _
    $region35: #{tpu_custom_call.1} parent=1 // pred_check_branch
      %150 = sbr.rel (0) target = $region37
    $region36: #{tpu_custom_call.1} parent=1 // pred_region
      %s152 = ssub.s32 128, 128
      %153 = vsyncadd [#allocation5], %s152
      %s154 = sshll.u32 [#allocation8], 4
      %s155 = int_to_ptr.vmem [resolvable:$true] %s154
      %160 = dma.vmem_to_hbm [thread:$0]  %s155, 128, %s3, [#allocation5], 64, 64, 4
    $region37: #{tpu_custom_call.1} parent=1 // pred_fallthru
      _
    // Predicated region
    $region38: #{tpu_custom_call.1} parent=1 // pred_check
      _
    $region39: #{tpu_custom_call.1} parent=1 // pred_check_branch
      %162 = sbr.rel (0) target = $region41
    $region40: #{tpu_custom_call.1} parent=1 // pred_region
      %163 = dma.done [#allocation5], 128
    $region41: #{tpu_custom_call.1} parent=1 // pred_fallthru
      _
    %164 = vsyncpa [#allocation4], 1
    %165 = vsyncpa [#allocation7], 1
    %166 = vsyncpa [#allocation5], 1

</llo_original>
